<compile_context>
chip_gen: v5e
topology: v5e:2x2
jax: 0.10.0
libtpu: 0.0.40
codegen_flags: <defaults>
</compile_context>

<pallas_src>
import functools

import jax
import jax.numpy as jnp
import numpy as np
from jax import lax
from jax.experimental import pallas as pl
from jax.experimental.pallas import tpu as pltpu


def _build_rope_cache(dim: int, max_seq_len: int):
    """Deterministic buffer construction, identical to RoPE3D._build_cache."""
    inv_freq = 1.0 / (10000.0 ** (jnp.arange(0, dim, 2, dtype=jnp.float32) / dim))
    positions = jnp.arange(max_seq_len, dtype=jnp.float32)
    freqs = jnp.einsum("i,j->ij", positions, inv_freq)   # (max_seq_len, dim//2)
    return jnp.cos(freqs), jnp.sin(freqs)


def make_rope3d(dim: int, max_seq_len: int = 10000):
    """Mirror of RoPE3D.__init__: builds caches once (cache prep hoisted out of
    the per-call path). Returns (forward_fn, (cos_cache, sin_cache))."""
    cos_cache, sin_cache = _build_rope_cache(dim, max_seq_len)
    half = dim // 2
    assert half % 2 == 0, "pairwise RoPE rotation requires an even pair width"
    # Fold the alternating (-,+) rotation sign into sin once (even lanes
    # negated). Done here, not per forward call.
    sign = jnp.where(jnp.arange(half) % 2 == 0, -1.0, 1.0).astype(jnp.float32)
    sin_signed = sin_cache * sign[None, :]

    def forward(x, seq_dim: int = 1):
        return rope3d_forward(x, cos_cache, sin_signed, seq_dim=seq_dim)

    return forward, (cos_cache, sin_cache)


def _rope_kernel(cos_ref, sin_ref, x_ref, o_ref, *, heads: int):
    """One (TM, H*D) tile of one batch element.

    cos_ref/sin_ref: (TM, D) un-tiled cache rows (sin carries the (-,+) sign).
    x_ref/o_ref:     (TM, H*D) lane-dense activation tile (batch dim squeezed).
    """
    x = x_ref[...]                                   # (TM, HD)
    hd = x.shape[-1]

    # Broadcast the (TM, D) caches across heads on-chip instead of streaming
    # head-tiled caches from HBM; lane concat is cheap and hidden under DMA.
    cos = jnp.concatenate([cos_ref[...]] * heads, axis=-1)   # (TM, HD) f32
    sin = jnp.concatenate([sin_ref[...]] * heads, axis=-1)   # (TM, HD) f32

    # Pairwise rotation source: even lanes need x[i+1], odd lanes need x[i-1]
    # (signs are pre-folded into sin). NOTE: roll wraps across head boundaries
    # in the flattened H*D lane axis, but because D is even the wrapped lanes
    # are never selected (even lanes only take r_next, odd lanes only r_prev),
    # so the wrap is harmless. Non-negative shift/axis only (pltpu.roll
    # rejects negatives).
    r_next = pltpu.roll(x, shift=hd - 1, axis=1)     # result[i] = x[(i+1) % hd]
    r_prev = pltpu.roll(x, shift=1, axis=1)          # result[i] = x[(i-1) % hd]

    lane = lax.broadcasted_iota(jnp.int32, (1, hd), 1)   # single row, broadcasts
    x_shift = jnp.where((lane & 1) == 0, r_next, r_prev)

    out = x.astype(jnp.float32) * cos + x_shift.astype(jnp.float32) * sin
    o_ref[...] = out.astype(o_ref.dtype)


def rope3d_forward(x, cos_cache, sin_signed_cache, seq_dim: int = 1, *,
                   vmem_workingset_bytes: int = 16 * 1024 * 1024):
    """Pallas implementation of RoPE3D.forward for seq_dim == 1.

    x: (B, S, H, D) with D == dim // 2 (so it broadcasts against the caches).
    sin_signed_cache: sin cache with the (-,+) rotation sign already folded in
    (see make_rope3d).
    """
    assert seq_dim == 1, "kernel implemented for seq_dim == 1"
    B, S, H, D = x.shape
    assert D % 2 == 0, "pairwise RoPE rotation requires an even last dim"
    HD = H * D
    # TODO(synk): the `if seq_len > max_seq_len: self._build_cache()` branch in
    # the original module is a no-op rebuild; here we just require S to fit.
    assert S <= cos_cache.shape[0], "seq_len exceeds the prebuilt RoPE cache"

    cos = cos_cache[:S].astype(jnp.float32)          # (S, D)
    sin = sin_signed_cache[:S].astype(jnp.float32)   # (S, D), sign-folded

    # Lane-dense view of x: heads flattened into the lane dimension.
    # If HD is not a multiple of 128 the stores fall back to masked partial
    # stores (correct but slower); H*D == 128 here.
    x2 = x.reshape(B, S, HD)

    # Row tile sized from the FULL double-buffered working set:
    # 2 buffers x (x block + out block at x dtype, cos + sin blocks at f32).
    # Capped at ~16 MiB so it fits v5e's 16 MiB default scoped VMEM and leaves
    # ample headroom on v7x's 64 MiB total VMEM; vmem_limit_bytes raised to
    # 32 MiB explicitly.
    x_isz = np.dtype(x.dtype).itemsize
    per_row_bytes = 2 * HD * x_isz + 2 * D * 4       # one buffer set, per row
    tm = max(8, vmem_workingset_bytes // (2 * per_row_bytes))
    if tm >= S:
        tm = S                                       # full dim is always legal
    else:
        tm = (tm // 8) * 8                           # f32 sublane multiple

    # Batch innermost (fastest-varying): cos/sin block indices are unchanged
    # across b, so Pallas skips their re-DMA -> caches fetched once per S-tile.
    grid = (pl.cdiv(S, tm), B)

    kernel = functools.partial(_rope_kernel, heads=H)

    out = pl.pallas_call(
        kernel,
        out_shape=jax.ShapeDtypeStruct((B, S, HD), x.dtype),
        grid_spec=pltpu.PrefetchScalarGridSpec(
            num_scalar_prefetch=0,
            grid=grid,
            in_specs=[
                pl.BlockSpec((tm, D), lambda i, b: (i, 0)),            # cos
                pl.BlockSpec((tm, D), lambda i, b: (i, 0)),            # sin (signed)
                pl.BlockSpec((None, tm, HD), lambda i, b: (b, i, 0)),  # x (batch squeezed)
            ],
            out_specs=pl.BlockSpec((None, tm, HD), lambda i, b: (b, i, 0)),
        ),
        # x (input index 2) and the output have identical shape/dtype; x2 is a
        # kernel-private reshape of x, so aliasing avoids a second B*S*H*D
        # HBM buffer.
        input_output_aliases={2: 0},
        compiler_params=pltpu.CompilerParams(
            dimension_semantics=("parallel", "parallel"),
            vmem_limit_bytes=32 * 1024 * 1024,
        ),
    )(cos, sin, x2)

    return out.reshape(B, S, H, D)


def rope3d_ref(x, cos_cache, sin_cache, seq_dim: int = 1):
    """Pure-JAX transcription of the PyTorch forward (for verification)."""
    seq_len = x.shape[seq_dim]
    cos = cos_cache[:seq_len]
    sin = sin_cache[:seq_len]
    xr = x.reshape(*x.shape[:-1], -1, 2)
    xr = jnp.stack([-xr[..., 1], xr[..., 0]], axis=-1).reshape(x.shape)
    cos = cos[:, None, :]
    sin = sin[:, None, :]
    return x * cos + xr * sin


if __name__ == "__main__":
    # Module config: dim=64 -> cos/sin caches of width dim//2 = 32.
    dim = 64
    max_seq_len = 64        # small deterministic cache (original default 10000)

    rope_fwd, (cos_cache, sin_cache) = make_rope3d(dim, max_seq_len)

    # Input: (batch=2, seq=8, heads=4, hidden=dim//2=32), seq_dim=1. H*D = 128.
    key = jax.random.PRNGKey(0)
    x = jax.random.normal(key, (2, 8, 4, dim // 2), dtype=jnp.float32)

    out = jax.block_until_ready(rope_fwd(x, seq_dim=1))

    ref = rope3d_ref(x, cos_cache, sin_cache, seq_dim=1)
    np.testing.assert_allclose(np.asarray(out), np.asarray(ref),
                               rtol=1e-5, atol=1e-5)
    print("KERNEL_OK")
</pallas_src>

<mosaic_0001>
module attributes {stable_mosaic.version = 11 : i64} {
  func.func @_rope_kernel(%arg0: i32, %arg1: i32, %arg2: memref<8x32xf32, #tpu.memory_space<vmem>>, %arg3: memref<8x32xf32, #tpu.memory_space<vmem>>, %arg4: memref<1x8x128xf32, #tpu.memory_space<vmem>>, %arg5: memref<1x8x128xf32, #tpu.memory_space<vmem>>) attributes {dimension_semantics = [#tpu.dimension_semantics<parallel>, #tpu.dimension_semantics<parallel>], iteration_bounds = array<i64: 1, 2>, scalar_prefetch = 0 : i64, scratch_operands = 0 : i64, tpu.core_type = #tpu.core_type<tc>, window_params = [{transform_indices = @transform_0, window_bounds = array<i64: 8, 32>}, {transform_indices = @transform_1, window_bounds = array<i64: 8, 32>}, {transform_indices = @transform_2, window_bounds = array<i64: 1, 8, 128>}, {transform_indices = @transform_3, window_bounds = array<i64: 1, 8, 128>}]} {
    %c0 = arith.constant 0 : index
    %c0_0 = arith.constant 0 : index
    %c0_1 = arith.constant 0 : index
    %0 = vector.load %arg4[%c0, %c0_0, %c0_1] : memref<1x8x128xf32, #tpu.memory_space<vmem>>, vector<1x8x128xf32>
    %1 = vector.shape_cast %0 : vector<1x8x128xf32> to vector<8x128xf32>
    %c0_2 = arith.constant 0 : index
    %c0_3 = arith.constant 0 : index
    %2 = vector.load %arg2[%c0_2, %c0_3] : memref<8x32xf32, #tpu.memory_space<vmem>>, vector<8x32xf32>
    %3 = tpu.concatenate %2, %2, %2, %2 in 1 : vector<8x32xf32>, vector<8x32xf32>, vector<8x32xf32>, vector<8x32xf32> -> vector<8x128xf32>
    %c0_4 = arith.constant 0 : index
    %c0_5 = arith.constant 0 : index
    %4 = vector.load %arg3[%c0_4, %c0_5] : memref<8x32xf32, #tpu.memory_space<vmem>>, vector<8x32xf32>
    %5 = tpu.concatenate %4, %4, %4, %4 in 1 : vector<8x32xf32>, vector<8x32xf32>, vector<8x32xf32>, vector<8x32xf32> -> vector<8x128xf32>
    %c127_i32 = arith.constant 127 : i32
    %6 = tpu.dynamic_rotate %1 by %c127_i32 dim 1 : vector<8x128xf32>, i32 -> vector<8x128xf32>
    %c1_i32 = arith.constant 1 : i32
    %7 = tpu.dynamic_rotate %1 by %c1_i32 dim 1 : vector<8x128xf32>, i32 -> vector<8x128xf32>
    %8 = tpu.iota {dimensions = array<i32: 1>} : vector<1x128xi32>
    %c1_i32_6 = arith.constant 1 : i32
    %9 = vector.broadcast %c1_i32_6 : i32 to vector<1x128xi32>
    %10 = arith.andi %8, %9 : vector<1x128xi32>
    %c0_i32 = arith.constant 0 : i32
    %11 = vector.broadcast %c0_i32 : i32 to vector<1x128xi32>
    %12 = arith.cmpi eq, %10, %11 : vector<1x128xi32>
    %13 = vector.shape_cast %12 : vector<1x128xi1> to vector<1x128xi1>
    %14 = vector.broadcast %13 : vector<1x128xi1> to vector<8x128xi1>
    %15 = arith.select %14, %6, %7 : vector<8x128xi1>, vector<8x128xf32>
    %16 = arith.mulf %1, %3 : vector<8x128xf32>
    %17 = arith.mulf %15, %5 : vector<8x128xf32>
    %18 = arith.addf %16, %17 : vector<8x128xf32>
    %c0_7 = arith.constant 0 : index
    %c0_8 = arith.constant 0 : index
    %c0_9 = arith.constant 0 : index
    %19 = vector.load %arg5[%c0_7, %c0_8, %c0_9] : memref<1x8x128xf32, #tpu.memory_space<vmem>>, vector<1x8x128xf32>
    %20 = vector.shape_cast %19 : vector<1x8x128xf32> to vector<8x128xf32>
    %21 = vector.shape_cast %18 : vector<8x128xf32> to vector<1x8x128xf32>
    tpu.vector_store %arg5[%c0_7, %c0_8, %c0_9], %21 {strides = array<i32>} : memref<1x8x128xf32, #tpu.memory_space<vmem>>, vector<1x8x128xf32>,
    return
  }
  func.func @transform_0(%arg0: i32, %arg1: i32) -> (i32, i32) {
    %c0_i32 = arith.constant 0 : i32
    %c0_i32_0 = arith.constant 0 : i32
    return %arg0, %c0_i32 : i32, i32
  }
  func.func @transform_1(%arg0: i32, %arg1: i32) -> (i32, i32) {
    %c0_i32 = arith.constant 0 : i32
    %c0_i32_0 = arith.constant 0 : i32
    return %arg0, %c0_i32 : i32, i32
  }
  func.func @transform_2(%arg0: i32, %arg1: i32) -> (i32, i32, i32) {
    %c0_i32 = arith.constant 0 : i32
    %c0_i32_0 = arith.constant 0 : i32
    return %arg1, %arg0, %c0_i32 : i32, i32, i32
  }
  func.func @transform_3(%arg0: i32, %arg1: i32) -> (i32, i32, i32) {
    %c0_i32 = arith.constant 0 : i32
    %c0_i32_0 = arith.constant 0 : i32
    return %arg1, %arg0, %c0_i32 : i32, i32, i32
  }
}

</mosaic_0001>

<llo_original>
// kernel: tpu_custom_call.1
$region0: #{tpu_custom_call.1}
  #allocation0 [shape = 'u32[]', space=smem, size = 0x4, offset = 0x4, fixed_abs, tag = 'smem constant byte address 0x4 - core index']
  #allocation1 [shape = 'u32[72,128]{1,0:T(1,128)}', space=vmem, size = 0x9000, scoped, tag = 'internal scratch']
  %s0 = inlined_call_operand.vmem [shape: f32[8,32], index: 0, kind: input, shape index: {}]
  %s1 = inlined_call_operand.vmem [shape: f32[8,32], index: 1, kind: input, shape index: {}]
  %s2 = inlined_call_operand.hbm [shape: f32[2,8,128], index: 2, kind: input, shape index: {}, may-alias: {2,3}]
  %s3 = inlined_call_operand.hbm [shape: f32[2,8,128], index: 3, kind: output, shape index: {}, may-alias: {2,3}]
  %s4 = sld [smem:[#allocation0]]
  $region49: #{tpu_custom_call.1} parent=0
    _
  %s6 = ssub.s32 1, %s4
  %s7 = scalar_select 0, %s6, %s4
  $region1: #{tpu_custom_call.1} parent=0
    #allocation2 [shape = 'u8[8192]{0}', space=vmem, size = 0x2000, scoped, tag = 'input window, operand 2']
    #allocation3 [shape = 's32[2]{0}', space=sflag, size = 0x8, scoped, tag = 'scoped memory for tpu_custom_call.1']
    #allocation4 [shape = 's32[2]{0}', space=sflag, size = 0x8, scoped, tag = 'scoped memory for tpu_custom_call.1']
    #allocation5 [shape = 'u8[8192]{0}', space=vmem, size = 0x2000, scoped, tag = 'output window, operand 0']
    %8 = vsyncpa [#allocation3], 0
    %s9 = scalar_lea.sflag [#allocation3], 1
    %10 = vsyncpa %s9, 0
    %11 = vsyncpa [#allocation4], 0
    %s12 = scalar_lea.sflag [#allocation4], 1
    %13 = vsyncpa %s12, 0
    loop: start=0, step=1, limit=4
    $region2: #{tpu_custom_call.1} parent=1 // loop_pre_header
      _
    $region3: #{tpu_custom_call.1} parent=1 // loop_header
      %s15 = sphi 0, %s19
      %p16 = scmp.ge.s32.totalorder %s15, 4
      %s22 = sphi 0, %s34
      %s23 = sphi 0, %s30
      %s24 = sphi 0, %s22
      %s25 = sphi 0, %s23
      %s26 = sphi 0, %s24
      %s27 = sphi 0, %s25
      %s37 = sphi 0, %s39
      %s40 = sphi 0, %s37
      %s41 = sphi 0, %s40
      %s57 = sphi 0, %s41
      %s63 = sphi 0, %s65
      %s66 = sphi 0, %s63
      %s67 = sphi 0, %s66
      %s83 = sphi 0, %s67
      %s91 = sphi 0, %s93
      %s94 = sphi 0, %s91
      %s95 = sphi 0, %s94
      %s111 = sphi 0, %s95
      %s119 = sphi 0, %s121
      %s122 = sphi 0, %s119
      %s123 = sphi 0, %s122
      %s139 = sphi 0, %s123
    $region4: #{tpu_custom_call.1} parent=1 // loop_header_branch
      %18 = sbr.rel (%p16) target = $region8
    $region5: #{tpu_custom_call.1} parent=1 // loop_body
      %s20 = ssub.s32 %s15, 1
      %s21 = ssub.s32 %s15, 2
      %s28 = sadd.s32 1, %s23
      %p29 = scmp.ge.s32.totalorder %s28, 2
      %s30 = scalar_select %p29, 0, %s28
      %s31 = sadd.s32 1, %s22
      %s32 = scalar_select %p29, %s31, %s22
      %p33 = scmp.ge.s32.totalorder %s32, 1
      %s34 = scalar_select %p33, 0, %s32
      %s35 = ssub.s32 %s22, %s34
      %p36 = scmp.eq.s32.totalorder %s35, 0
      %s38 = sadd.s32 %s37, 1
      %s39 = scalar_select %p36, %s37, %s38
      %p42 = pneg %p36
      %p43 = scmp.eq.s32.totalorder %s15, 1
      %p44 = por %p42, %p43
      %p45 = scmp.ne.s32.totalorder %s37, %s40
      %p46 = scmp.eq.s32.totalorder %s15, 0
      %p47 = por %p45, %p46
      %p48 = scmp.ne.s32.totalorder %s37, %s40
      %p49 = scmp.eq.s32.totalorder %s20, 1
      %p50 = por %p48, %p49
      %p51 = scmp.ne.s32.totalorder %s40, %s41
      %p52 = scmp.eq.s32.totalorder %s20, 0
      %p53 = por %p51, %p52
      %p54 = scmp.ne.s32.totalorder %s40, %s41
      %p55 = scmp.eq.s32.totalorder %s21, 1
      %p56 = por %p54, %p55
      %p58 = scmp.ne.s32.totalorder %s41, %s57
      %p59 = scmp.eq.s32.totalorder %s21, 0
      %p60 = por %p58, %p59
      %s61 = ssub.s32 %s22, %s34
      %p62 = scmp.eq.s32.totalorder %s61, 0
      %s64 = sadd.s32 %s63, 1
      %s65 = scalar_select %p62, %s63, %s64
      %p68 = pneg %p62
      %p69 = scmp.eq.s32.totalorder %s15, 1
      %p70 = por %p68, %p69
      %p71 = scmp.ne.s32.totalorder %s63, %s66
      %p72 = scmp.eq.s32.totalorder %s15, 0
      %p73 = por %p71, %p72
      %p74 = scmp.ne.s32.totalorder %s63, %s66
      %p75 = scmp.eq.s32.totalorder %s20, 1
      %p76 = por %p74, %p75
      %p77 = scmp.ne.s32.totalorder %s66, %s67
      %p78 = scmp.eq.s32.totalorder %s20, 0
      %p79 = por %p77, %p78
      %p80 = scmp.ne.s32.totalorder %s66, %s67
      %p81 = scmp.eq.s32.totalorder %s21, 1
      %p82 = por %p80, %p81
      %p84 = scmp.ne.s32.totalorder %s67, %s83
      %p85 = scmp.eq.s32.totalorder %s21, 0
      %p86 = por %p84, %p85
      %s87 = ssub.s32 %s23, %s30
      %s88 = ssub.s32 %s22, %s34
      %s89 = sor.u32 %s87, %s88
      %p90 = scmp.eq.s32.totalorder %s89, 0
      %s92 = sadd.s32 %s91, 1
      %s93 = scalar_select %p90, %s91, %s92
      %p96 = pneg %p90
      %p97 = scmp.eq.s32.totalorder %s15, 1
      %p98 = por %p96, %p97
      %p99 = scmp.ne.s32.totalorder %s91, %s94
      %p100 = scmp.eq.s32.totalorder %s15, 0
      %p101 = por %p99, %p100
      %p102 = scmp.ne.s32.totalorder %s91, %s94
      %p103 = scmp.eq.s32.totalorder %s20, 1
      %p104 = por %p102, %p103
      %p105 = scmp.ne.s32.totalorder %s94, %s95
      %p106 = scmp.eq.s32.totalorder %s20, 0
      %p107 = por %p105, %p106
      %p108 = scmp.ne.s32.totalorder %s94, %s95
      %p109 = scmp.eq.s32.totalorder %s21, 1
      %p110 = por %p108, %p109
      %p112 = scmp.ne.s32.totalorder %s95, %s111
      %p113 = scmp.eq.s32.totalorder %s21, 0
      %p114 = por %p112, %p113
      %s115 = ssub.s32 %s23, %s30
      %s116 = ssub.s32 %s22, %s34
      %s117 = sor.u32 %s115, %s116
      %p118 = scmp.eq.s32.totalorder %s117, 0
      %s120 = sadd.s32 %s119, 1
      %s121 = scalar_select %p118, %s119, %s120
      %p124 = pneg %p118
      %p125 = scmp.eq.s32.totalorder %s15, 1
      %p126 = por %p124, %p125
      %p127 = scmp.ne.s32.totalorder %s119, %s122
      %p128 = scmp.eq.s32.totalorder %s15, 0
      %p129 = por %p127, %p128
      %p130 = scmp.ne.s32.totalorder %s119, %s122
      %p131 = scmp.eq.s32.totalorder %s20, 1
      %p132 = por %p130, %p131
      %p133 = scmp.ne.s32.totalorder %s122, %s123
      %p134 = scmp.eq.s32.totalorder %s20, 0
      %p135 = por %p133, %p134
      %p136 = scmp.ne.s32.totalorder %s122, %s123
      %p137 = scmp.eq.s32.totalorder %s21, 1
      %p138 = por %p136, %p137
      %p140 = scmp.ne.s32.totalorder %s123, %s139
      %p141 = scmp.eq.s32.totalorder %s21, 0
      %p142 = por %p140, %p141
      %p143 = scmp.le.s32.totalorder 1, %s15
      %p144 = scmp.lt.s32.totalorder %s15, 3
      %p145 = pnand %p143, %p144
      %p146 = pneg %p145
      // Predicated region
      $region9: #{tpu_custom_call.1} parent=5 // pred_check
        _
      $region10: #{tpu_custom_call.1} parent=5 // pred_check_branch
        %148 = sbr.rel (%p145) target = $region12
      $region11: #{tpu_custom_call.1} parent=5 // pred_region
        %s149 = ssub.s32 %s15, 1
        // Predicated region
        $region13: #{tpu_custom_call.1} parent=11 // pred_check
          %p150 = pneg %p53
        $region14: #{tpu_custom_call.1} parent=11 // pred_check_branch
          %152 = sbr.rel (%p150) target = $region16
        $region15: #{tpu_custom_call.1} parent=11 // pred_region
          %p153 = scmp.lt.s32.totalorder %s24, 0
          %s154 = scalar_select %p153, %s24, 0
          %s155 = smul.addr %s154, 8
          %s156 = scalar_lea.vmem %s0, %s155
        $region16: #{tpu_custom_call.1} parent=11 // pred_fallthru
          _
        // Predicated region
        $region17: #{tpu_custom_call.1} parent=11 // pred_check
          %p157 = pneg %p79
        $region18: #{tpu_custom_call.1} parent=11 // pred_check_branch
          %159 = sbr.rel (%p157) target = $region20
        $region19: #{tpu_custom_call.1} parent=11 // pred_region
          %p160 = scmp.lt.s32.totalorder %s24, 0
          %s161 = scalar_select %p160, %s24, 0
          %s162 = smul.addr %s161, 8
          %s163 = scalar_lea.vmem %s1, %s162
        $region20: #{tpu_custom_call.1} parent=11 // pred_fallthru
          _
      $region12: #{tpu_custom_call.1} parent=5 // pred_fallthru
        _
      %p164 = scmp.lt.s32.totalorder %s15, 2
      // Predicated region
      $region21: #{tpu_custom_call.1} parent=5 // pred_check
        %p165 = pneg %p164
      $region22: #{tpu_custom_call.1} parent=5 // pred_check_branch
        %167 = sbr.rel (%p165) target = $region24
      $region23: #{tpu_custom_call.1} parent=5 // pred_region
        // Predicated region
        $region25: #{tpu_custom_call.1} parent=23 // pred_check
          %p168 = pneg %p101
        $region26: #{tpu_custom_call.1} parent=23 // pred_check_branch
          %170 = sbr.rel (%p168) target = $region28
        $region27: #{tpu_custom_call.1} parent=23 // pred_region
          %s171 = sand.u32 %s91, 1
          %s172 = scalar_lea.sflag [#allocation3], %s171
          %s173 = sand.u32 %s91, 1
          %s174 = smul.addr %s173, 8
          %s175 = scalar_lea.vmem [#allocation2], %s174
          %177 = vsyncadd %s172, 0
          %s178 = sadd.s32 %s22, %s23
          %s179 = smul.addr %s178, 8
          %s180 = scalar_lea.hbm %s2, %s179
          %s182 = sshll.u32 %s180, 4
          %s183 = int_to_ptr.hbm [resolvable:$true] %s182
          %s184 = sshll.u32 %s175, 4
          %s185 = int_to_ptr.vmem [resolvable:$true] %s184
          %187 = dma.hbm_to_vmem [thread:$0]  %s183, 128, %s185, %s172
        $region28: #{tpu_custom_call.1} parent=23 // pred_fallthru
          _
      $region24: #{tpu_custom_call.1} parent=5 // pred_fallthru
        _
      %p188 = scmp.le.s32.totalorder 1, %s15
      %p189 = scmp.lt.s32.totalorder %s15, 3
      %p190 = pnand %p188, %p189
      %p191 = pneg %p190
      // Predicated region
      $region29: #{tpu_custom_call.1} parent=5 // pred_check
        _
      $region30: #{tpu_custom_call.1} parent=5 // pred_check_branch
        %193 = sbr.rel (%p190) target = $region32
      $region31: #{tpu_custom_call.1} parent=5 // pred_region
        %s194 = ssub.s32 %s15, 1
        %s195 = sand.u32 %s94, 1
        %s196 = scalar_lea.sflag [#allocation3], %s195
        %s197 = sand.u32 %s94, 1
        %s198 = smul.addr %s197, 8
        %s199 = scalar_lea.vmem [#allocation2], %s198
        // Predicated region
        $region33: #{tpu_custom_call.1} parent=31 // pred_check
          %p200 = pneg %p107
        $region34: #{tpu_custom_call.1} parent=31 // pred_check_branch
          %202 = sbr.rel (%p200) target = $region36
        $region35: #{tpu_custom_call.1} parent=31 // pred_region
          %204 = dma.done %s196, 128
        $region36: #{tpu_custom_call.1} parent=31 // pred_fallthru
          _
        %p205 = scmp.lt.s32.totalorder %s24, 0
        %s206 = scalar_select %p205, %s24, 0
        %s207 = smul.addr %s206, 8
        %s208 = scalar_lea.vmem %s0, %s207
        %p209 = pneg %p53
        %p210 = pneg %p50
        %p211 = scmp.lt.s32.totalorder %s24, 0
        %s212 = scalar_select %p211, %s24, 0
        %s213 = smul.addr %s212, 8
        %s214 = scalar_lea.vmem %s1, %s213
        %p215 = pneg %p79
        %p216 = pneg %p76
        %s217 = sand.u32 %s94, 1
        %s218 = scalar_lea.sflag [#allocation3], %s217
        %s219 = sand.u32 %s94, 1
        %s220 = smul.addr %s219, 8
        %s221 = scalar_lea.vmem [#allocation2], %s220
        %p222 = pneg %p107
        %p223 = pneg %p104
        %p224 = pneg %p135
        %p225 = pneg %p132
        %s226 = sand.u32 %s122, 1
        %s227 = scalar_lea.sflag [#allocation4], %s226
        %s228 = sand.u32 %s122, 1
        %s229 = smul.addr %s228, 8
        %s230 = scalar_lea.vmem [#allocation5], %s229
        %p231 = scmp.lt.s32.totalorder %s24, 0
        %s232 = scalar_select %p231, %s24, 0
        %s233 = smul.addr %s232, 8
        %s234 = scalar_lea.vmem %s0, %s233
        %p235 = scmp.lt.s32.totalorder %s24, 0
        %s236 = scalar_select %p235, %s24, 0
        %s237 = smul.addr %s236, 8
        %s238 = scalar_lea.vmem %s1, %s237
        %v239 = vld [vmem:[%s199] sm:$0xff]
        %v240 = vld [vmem:[%s234] sm:$0xff]
        %242 = vrot.lane.b32.xlu0 %v240, 32
        %v243 = vpop.permute.xlu0 %242
        %245 = vrot.lane.b32.xlu0 %v240, 64
        %v246 = vpop.permute.xlu0 %245
        %248 = vrot.lane.b32.xlu0 %v240, 96
        %v249 = vpop.permute.xlu0 %248
        %vm251 = vcmask 261120
        %v252 = vsel %vm251, %v240, %v243
        %vm253 = vcmask 523264
        %v254 = vsel %vm253, %v252, %v246
        %vm255 = vcmask 785408
        %v256 = vsel %vm255, %v254, %v249
        %v257 = vld [vmem:[%s238] sm:$0xff]
        %259 = vrot.lane.b32.xlu0 %v257, 32
        %v260 = vpop.permute.xlu0 %259
        %262 = vrot.lane.b32.xlu0 %v257, 64
        %v263 = vpop.permute.xlu0 %262
        %265 = vrot.lane.b32.xlu0 %v257, 96
        %v266 = vpop.permute.xlu0 %265
        %v268 = vsel %vm251, %v257, %v260
        %v269 = vsel %vm253, %v268, %v263
        %v270 = vsel %vm255, %v269, %v266
        %271 = vrot.lane.b32.xlu0 %v239, 127
        %v272 = vpop.permute.xlu0 %271
        %273 = vrot.lane.b32.xlu0 %v239, 1
        %v274 = vpop.permute.xlu0 %273
        %v275 = vlaneseq
        %v276 = vand.u32 %v275, 127
        %v277 = vand.u32 %v276, 1
        %vm278 = vcmp.eq.s32.totalorder %v277, 0
        %v279 = vsel %vm278, 1, 0
        %vm280 = vcmp.eq.s32.totalorder %v279, 1
        %v281 = vsel %vm280, %v272, %v274
        %v282 = vmul.f32 %v239, %v256
        %v283 = vmul.f32 %v281, %v270
        %v284 = vadd.f32 %v282, %v283
        %285 = vst [vmem:[%s230] sm:$0xff] %v284
        %s286 = sand.u32 %s122, 1
        %s287 = scalar_lea.sflag [#allocation4], %s286
        %s288 = sand.u32 %s122, 1
        %s289 = smul.addr %s288, 8
        %s290 = scalar_lea.vmem [#allocation5], %s289
        // Predicated region
        $region37: #{tpu_custom_call.1} parent=31 // pred_check
          %p291 = pneg %p132
        $region38: #{tpu_custom_call.1} parent=31 // pred_check_branch
          %293 = sbr.rel (%p291) target = $region40
        $region39: #{tpu_custom_call.1} parent=31 // pred_region
          %295 = vsyncadd %s287, 0
          %s296 = sadd.s32 %s24, %s25
          %s297 = smul.addr %s296, 8
          %s298 = scalar_lea.hbm %s3, %s297
          %s300 = sshll.u32 %s290, 4
          %s301 = int_to_ptr.vmem [resolvable:$true] %s300
          %s302 = sshll.u32 %s298, 4
          %s303 = int_to_ptr.hbm [resolvable:$true] %s302
          %305 = dma.vmem_to_hbm [thread:$0]  %s301, 128, %s303, %s287
        $region40: #{tpu_custom_call.1} parent=31 // pred_fallthru
          _
      $region32: #{tpu_custom_call.1} parent=5 // pred_fallthru
        _
      %p306 = scmp.le.s32.totalorder 2, %s15
      // Predicated region
      $region41: #{tpu_custom_call.1} parent=5 // pred_check
        %p307 = pneg %p306
      $region42: #{tpu_custom_call.1} parent=5 // pred_check_branch
        %309 = sbr.rel (%p307) target = $region44
      $region43: #{tpu_custom_call.1} parent=5 // pred_region
        %s310 = ssub.s32 %s15, 2
        // Predicated region
        $region45: #{tpu_custom_call.1} parent=43 // pred_check
          %p311 = pneg %p138
        $region46: #{tpu_custom_call.1} parent=43 // pred_check_branch
          %313 = sbr.rel (%p311) target = $region48
        $region47: #{tpu_custom_call.1} parent=43 // pred_region
          %s314 = sand.u32 %s123, 1
          %s315 = scalar_lea.sflag [#allocation4], %s314
          %s316 = sand.u32 %s123, 1
          %s317 = smul.addr %s316, 8
          %s318 = scalar_lea.vmem [#allocation5], %s317
          %320 = dma.done %s315, 128
        $region48: #{tpu_custom_call.1} parent=43 // pred_fallthru
          _
      $region44: #{tpu_custom_call.1} parent=5 // pred_fallthru
        _
    $region6: #{tpu_custom_call.1} parent=1 // loop_footer
      %s19 = sadd.s32 1, %s15
    $region7: #{tpu_custom_call.1} parent=1 // loop_footer_branch
      %14 = sbr.rel target = $region3
    $region8: #{tpu_custom_call.1} parent=1 // loop_exit
      _
    %321 = vsyncpa [#allocation3], 1
    %s322 = scalar_lea.sflag [#allocation3], 1
    %323 = vsyncpa %s322, 1
    %324 = vsyncpa [#allocation4], 1
    %s325 = scalar_lea.sflag [#allocation4], 1
    %326 = vsyncpa %s325, 1

</llo_original>
